<compile_context>
chip_gen: v7x
topology: tpu7x:2x2x1
jax: 0.10.0
libtpu: 0.0.40
codegen_flags: <defaults>
</compile_context>

<pallas_src>
import jax
import jax.numpy as jnp
from jax.experimental import pallas as pl
from jax.experimental.pallas import tpu as pltpu  # noqa: F401  (TPU backend)


def _policy_kernel(x_ref, w1_ref, b1_ref, w2_ref, b2_ref, out_ref):
    # x_ref:  (B, 4)     w1_ref: (4, 128)   b1_ref: (1, 128)
    # w2_ref: (2, 128)   b2_ref: (1, 2)     out_ref: (B, 128)  (lanes 0..1 meaningful)
    x = x_ref[...]
    B = x.shape[0]

    # ---- fc1 + ReLU: 4 unrolled VPU FMAs (no MXU) -------------------------------
    h = b1_ref[...] + x[:, 0:1] * w1_ref[0:1, :]          # (1,128)+(B,1)*(1,128) -> (B,128)
    for k in range(1, 4):                                  # static unroll, K = 4
        h = h + x[:, k : k + 1] * w1_ref[k : k + 1, :]
    h = jnp.maximum(h, 0.0)

    # ---- fc2: two lane reductions (XLU) instead of an N=2 MXU matmul ------------
    l0 = jnp.sum(h * w2_ref[0:1, :], axis=-1, keepdims=True) + b2_ref[:, 0:1]  # (B,1)
    l1 = jnp.sum(h * w2_ref[1:2, :], axis=-1, keepdims=True) + b2_ref[:, 1:2]  # (B,1)

    # ---- assemble lane-dense (B, 128) logits; only lanes 0 and 1 are meaningful -
    lane = jax.lax.broadcasted_iota(jnp.int32, (B, 128), 1)
    logits = jnp.where(lane == 0, l0, jnp.where(lane == 1, l1, 0.0))

    # ---- softmax over dim=0 (batch axis); column-wise so padded lanes are inert -
    m = jnp.max(logits, axis=0, keepdims=True)             # (1, 128)
    e = jnp.exp(logits - m)                                # EUP
    denom = jnp.sum(e, axis=0, keepdims=True)
    inv = pl.reciprocal(denom, approx=True)                # EUP slot
    inv = inv * (2.0 - denom * inv)                        # one Newton step -> ~f32 accurate
    out_ref[...] = (e * inv).astype(out_ref.dtype)


def policy_forward(x, w1, b1, w2, b2):
    """x: (B, 4) f32 -> (B, 2) f32 probabilities (softmax taken over dim=0)."""
    B = x.shape[0]
    # Tiny single-block problem: full-array blocks, no grid, everything in VMEM.
    full = lambda shape: pl.BlockSpec(shape, lambda: (0,) * len(shape))
    out_padded = pl.pallas_call(
        _policy_kernel,
        out_shape=jax.ShapeDtypeStruct((B, 128), jnp.float32),  # lane-dense store
        grid=(),
        in_specs=[
            full(x.shape),
            full(w1.shape),
            full(b1.shape),
            full(w2.shape),
            full(b2.shape),
        ],
        out_specs=full((B, 128)),
    )(x, w1, b1, w2, b2)
    return out_padded[:, :2]


def init_params(key):
    """Deterministic init mimicking nn.Linear's uniform(-1/sqrt(fan_in), +)."""
    k1, k2, k3, k4 = jax.random.split(key, 4)
    bound1 = 1.0 / jnp.sqrt(4.0)
    bound2 = 1.0 / jnp.sqrt(128.0)
    w1 = jax.random.uniform(k1, (4, 128), jnp.float32, -bound1, bound1)   # fc1.weight.T
    b1 = jax.random.uniform(k2, (1, 128), jnp.float32, -bound1, bound1)
    w2 = jax.random.uniform(k3, (2, 128), jnp.float32, -bound2, bound2)   # fc2.weight (PyTorch layout)
    b2 = jax.random.uniform(k4, (1, 2), jnp.float32, -bound2, bound2)
    return w1, b1, w2, b2


def reference_forward(x, w1, b1, w2, b2):
    h = jnp.maximum(x @ w1 + b1, 0.0)
    logits = h @ w2.T + b2
    return jax.nn.softmax(logits, axis=0)


# TODO(synk): put_data/train_net (Adam update, REINFORCE loss, Categorical sampling)
# are host-side training logic and are not part of the forward pass kernel.

if __name__ == "__main__":
    key = jax.random.PRNGKey(0)
    kx, kp = jax.random.split(key)

    B = 2  # small batch of CartPole-style observations (4 features each)
    x = jax.random.normal(kx, (B, 4), jnp.float32)
    w1, b1, w2, b2 = init_params(kp)

    out = policy_forward(x, w1, b1, w2, b2)
    out = jax.block_until_ready(out)

    ref = reference_forward(x, w1, b1, w2, b2)
    assert out.shape == (B, 2)
    assert jnp.allclose(out, ref, atol=1e-4, rtol=1e-4), (out, ref)
    # softmax over dim=0 -> each column sums to 1
    assert jnp.allclose(jnp.sum(out, axis=0), jnp.ones((2,)), atol=1e-4)

    print("KERNEL_OK")
</pallas_src>

<mosaic_0001>
module attributes {stable_mosaic.version = 11 : i64} {
  func.func @_policy_kernel(%arg0: memref<2x4xf32, #tpu.memory_space<vmem>>, %arg1: memref<4x128xf32, #tpu.memory_space<vmem>>, %arg2: memref<1x128xf32, #tpu.memory_space<vmem>>, %arg3: memref<2x128xf32, #tpu.memory_space<vmem>>, %arg4: memref<1x2xf32, #tpu.memory_space<vmem>>, %arg5: memref<2x128xf32, #tpu.memory_space<vmem>>) attributes {dimension_semantics = [], scalar_prefetch = 0 : i64, scratch_operands = 0 : i64, tpu.core_type = #tpu.core_type<tc>} {
    %c0 = arith.constant 0 : index
    %c0_0 = arith.constant 0 : index
    %0 = vector.load %arg0[%c0, %c0_0] : memref<2x4xf32, #tpu.memory_space<vmem>>, vector<2x4xf32>
    %c0_1 = arith.constant 0 : index
    %c0_2 = arith.constant 0 : index
    %1 = vector.load %arg2[%c0_1, %c0_2] : memref<1x128xf32, #tpu.memory_space<vmem>>, vector<1x128xf32>
    %2 = vector.extract_strided_slice %0 {offsets = [0, 0], sizes = [2, 1], strides = [1, 1]} : vector<2x4xf32> to vector<2x1xf32>
    %c0_3 = arith.constant 0 : index
    %c0_4 = arith.constant 0 : index
    %3 = vector.load %arg1[%c0_3, %c0_4] : memref<4x128xf32, #tpu.memory_space<vmem>>, vector<1x128xf32>
    %4 = vector.broadcast %2 : vector<2x1xf32> to vector<2x128xf32>
    %5 = vector.broadcast %3 : vector<1x128xf32> to vector<2x128xf32>
    %6 = arith.mulf %4, %5 : vector<2x128xf32>
    %7 = vector.broadcast %1 : vector<1x128xf32> to vector<2x128xf32>
    %8 = arith.addf %7, %6 : vector<2x128xf32>
    %9 = vector.extract_strided_slice %0 {offsets = [0, 1], sizes = [2, 1], strides = [1, 1]} : vector<2x4xf32> to vector<2x1xf32>
    %c1 = arith.constant 1 : index
    %c0_5 = arith.constant 0 : index
    %10 = vector.load %arg1[%c1, %c0_5] : memref<4x128xf32, #tpu.memory_space<vmem>>, vector<1x128xf32>
    %11 = vector.broadcast %9 : vector<2x1xf32> to vector<2x128xf32>
    %12 = vector.broadcast %10 : vector<1x128xf32> to vector<2x128xf32>
    %13 = arith.mulf %11, %12 : vector<2x128xf32>
    %14 = arith.addf %8, %13 : vector<2x128xf32>
    %15 = vector.extract_strided_slice %0 {offsets = [0, 2], sizes = [2, 1], strides = [1, 1]} : vector<2x4xf32> to vector<2x1xf32>
    %c2 = arith.constant 2 : index
    %c0_6 = arith.constant 0 : index
    %16 = vector.load %arg1[%c2, %c0_6] : memref<4x128xf32, #tpu.memory_space<vmem>>, vector<1x128xf32>
    %17 = vector.broadcast %15 : vector<2x1xf32> to vector<2x128xf32>
    %18 = vector.broadcast %16 : vector<1x128xf32> to vector<2x128xf32>
    %19 = arith.mulf %17, %18 : vector<2x128xf32>
    %20 = arith.addf %14, %19 : vector<2x128xf32>
    %21 = vector.extract_strided_slice %0 {offsets = [0, 3], sizes = [2, 1], strides = [1, 1]} : vector<2x4xf32> to vector<2x1xf32>
    %c3 = arith.constant 3 : index
    %c0_7 = arith.constant 0 : index
    %22 = vector.load %arg1[%c3, %c0_7] : memref<4x128xf32, #tpu.memory_space<vmem>>, vector<1x128xf32>
    %23 = vector.broadcast %21 : vector<2x1xf32> to vector<2x128xf32>
    %24 = vector.broadcast %22 : vector<1x128xf32> to vector<2x128xf32>
    %25 = arith.mulf %23, %24 : vector<2x128xf32>
    %26 = arith.addf %20, %25 : vector<2x128xf32>
    %cst = arith.constant 0.000000e+00 : f32
    %27 = vector.broadcast %cst : f32 to vector<2x128xf32>
    %28 = arith.maximumf %26, %27 : vector<2x128xf32>
    %c0_8 = arith.constant 0 : index
    %c0_9 = arith.constant 0 : index
    %29 = vector.load %arg3[%c0_8, %c0_9] : memref<2x128xf32, #tpu.memory_space<vmem>>, vector<1x128xf32>
    %30 = vector.broadcast %29 : vector<1x128xf32> to vector<2x128xf32>
    %31 = arith.mulf %28, %30 : vector<2x128xf32>
    %cst_10 = arith.constant dense<0.000000e+00> : vector<2xf32>
    %32 = vector.multi_reduction <add>, %31, %cst_10 [1] : vector<2x128xf32> to vector<2xf32>
    %33 = vector.shape_cast %32 : vector<2xf32> to vector<2x1xf32>
    %c0_11 = arith.constant 0 : index
    %c0_12 = arith.constant 0 : index
    %34 = vector.load %arg4[%c0_11, %c0_12] : memref<1x2xf32, #tpu.memory_space<vmem>>, vector<1x1xf32>
    %35 = vector.broadcast %34 : vector<1x1xf32> to vector<2x1xf32>
    %36 = arith.addf %33, %35 : vector<2x1xf32>
    %c1_13 = arith.constant 1 : index
    %c0_14 = arith.constant 0 : index
    %37 = vector.load %arg3[%c1_13, %c0_14] : memref<2x128xf32, #tpu.memory_space<vmem>>, vector<1x128xf32>
    %38 = vector.broadcast %37 : vector<1x128xf32> to vector<2x128xf32>
    %39 = arith.mulf %28, %38 : vector<2x128xf32>
    %cst_15 = arith.constant dense<0.000000e+00> : vector<2xf32>
    %40 = vector.multi_reduction <add>, %39, %cst_15 [1] : vector<2x128xf32> to vector<2xf32>
    %41 = vector.shape_cast %40 : vector<2xf32> to vector<2x1xf32>
    %c0_16 = arith.constant 0 : index
    %c1_17 = arith.constant 1 : index
    %42 = vector.load %arg4[%c0_16, %c1_17] : memref<1x2xf32, #tpu.memory_space<vmem>>, vector<1x1xf32>
    %43 = vector.broadcast %42 : vector<1x1xf32> to vector<2x1xf32>
    %44 = arith.addf %41, %43 : vector<2x1xf32>
    %45 = tpu.iota {dimensions = array<i32: 1>} : vector<2x128xi32>
    %c0_i32 = arith.constant 0 : i32
    %46 = vector.broadcast %c0_i32 : i32 to vector<2x128xi32>
    %47 = arith.cmpi eq, %45, %46 : vector<2x128xi32>
    %c1_i32 = arith.constant 1 : i32
    %48 = vector.broadcast %c1_i32 : i32 to vector<2x128xi32>
    %49 = arith.cmpi eq, %45, %48 : vector<2x128xi32>
    %cst_18 = arith.constant 0.000000e+00 : f32
    %50 = vector.shape_cast %44 : vector<2x1xf32> to vector<2x1xf32>
    %51 = vector.broadcast %50 : vector<2x1xf32> to vector<2x128xf32>
    %52 = vector.broadcast %cst_18 : f32 to vector<2x128xf32>
    %53 = arith.select %49, %51, %52 : vector<2x128xi1>, vector<2x128xf32>
    %54 = vector.shape_cast %36 : vector<2x1xf32> to vector<2x1xf32>
    %55 = vector.broadcast %54 : vector<2x1xf32> to vector<2x128xf32>
    %56 = arith.select %47, %55, %53 : vector<2x128xi1>, vector<2x128xf32>
    %cst_19 = arith.constant dense<0xFF800000> : vector<128xf32>
    %57 = vector.multi_reduction <maximumf>, %56, %cst_19 [0] : vector<2x128xf32> to vector<128xf32>
    %58 = vector.shape_cast %57 : vector<128xf32> to vector<1x128xf32>
    %59 = vector.broadcast %58 : vector<1x128xf32> to vector<2x128xf32>
    %60 = arith.subf %56, %59 : vector<2x128xf32>
    %61 = math.exp %60 : vector<2x128xf32>
    %cst_20 = arith.constant dense<0.000000e+00> : vector<128xf32>
    %62 = vector.multi_reduction <add>, %61, %cst_20 [0] : vector<2x128xf32> to vector<128xf32>
    %63 = vector.shape_cast %62 : vector<128xf32> to vector<1x128xf32>
    %64 = tpu.reciprocal %63 {approx = true} : vector<1x128xf32> -> vector<1x128xf32>
    %65 = arith.mulf %63, %64 : vector<1x128xf32>
    %cst_21 = arith.constant 2.000000e+00 : f32
    %66 = vector.broadcast %cst_21 : f32 to vector<1x128xf32>
    %67 = arith.subf %66, %65 : vector<1x128xf32>
    %68 = arith.mulf %64, %67 : vector<1x128xf32>
    %69 = vector.broadcast %68 : vector<1x128xf32> to vector<2x128xf32>
    %70 = arith.mulf %61, %69 : vector<2x128xf32>
    %c0_22 = arith.constant 0 : index
    %c0_23 = arith.constant 0 : index
    %71 = vector.load %arg5[%c0_22, %c0_23] : memref<2x128xf32, #tpu.memory_space<vmem>>, vector<2x128xf32>
    tpu.vector_store %arg5[%c0_22, %c0_23], %70 {strides = array<i32>} : memref<2x128xf32, #tpu.memory_space<vmem>>, vector<2x128xf32>,
    return
  }
}

</mosaic_0001>

<llo_original>
// kernel: tpu_custom_call.1
$region0: #{tpu_custom_call.1}
  #allocation0 [shape = 'u32[]', space=smem, size = 0x4, offset = 0x4, fixed_abs, tag = 'smem constant byte address 0x4 - core index']
  #allocation1 [shape = 'u32[144,128]{1,0:T(1,128)}', space=vmem, size = 0x12000, scoped, tag = 'internal scratch']
  %s0 = inlined_call_operand.hbm [shape: f32[2,4], index: 0, kind: input, shape index: {}]
  %s1 = inlined_call_operand.hbm [shape: f32[4,128], index: 1, kind: input, shape index: {}]
  %s2 = inlined_call_operand.vmem [shape: f32[1,128], index: 2, kind: input, shape index: {}]
  %s3 = inlined_call_operand.vmem [shape: f32[2,128], index: 3, kind: input, shape index: {}]
  %s4 = inlined_call_operand.vmem [shape: f32[1,2], index: 4, kind: input, shape index: {}]
  %s5 = inlined_call_operand.hbm [shape: f32[2,128], index: 5, kind: output, shape index: {}]
  %s6 = sld [smem:[#allocation0]]
  $region38: #{tpu_custom_call.1} parent=0
    _
  %s8 = ssub.s32 1, %s6
  %s9 = scalar_select 0, %s8, %s6
  $region1: #{tpu_custom_call.1} parent=0
    #allocation2 [shape = 'u8[1024]{0}', space=vmem, size = 0x400, scoped, tag = 'input window, operand 0, single buffered']
    #allocation3 [shape = 's32[1]{0}', space=sflag, size = 0x4, scoped, tag = 'scoped memory for tpu_custom_call.1']
    #allocation4 [shape = 's32[1]{0}', space=sflag, size = 0x4, scoped, tag = 'scoped memory for tpu_custom_call.1']
    #allocation5 [shape = 'u8[2048]{0}', space=vmem, size = 0x800, scoped, tag = 'input window, operand 1, single buffered']
    #allocation6 [shape = 's32[1]{0}', space=sflag, size = 0x4, scoped, tag = 'scoped memory for tpu_custom_call.1']
    #allocation7 [shape = 'u8[1024]{0}', space=vmem, size = 0x400, scoped, tag = 'output window, operand 0, single buffered']
    %10 = vsyncpa [#allocation3], 0
    %11 = vsyncpa [#allocation6], 0
    %12 = vsyncpa [#allocation4], 0
    // Predicated region
    $region2: #{tpu_custom_call.1} parent=1 // pred_check
      _
    $region3: #{tpu_custom_call.1} parent=1 // pred_check_branch
      %14 = sbr.rel (0) target = $region5
    $region4: #{tpu_custom_call.1} parent=1 // pred_region
      %s16 = ssub.s32 32, 32
      %17 = vsyncadd [#allocation3], %s16
      %s19 = sshll.u32 [#allocation2], 4
      %s20 = int_to_ptr.vmem [resolvable:$true] %s19
      %22 = dma.hbm_to_vmem [thread:$0]  %s0, 32, %s20, [#allocation3]
    $region5: #{tpu_custom_call.1} parent=1 // pred_fallthru
      _
    // Predicated region
    $region6: #{tpu_custom_call.1} parent=1 // pred_check
      _
    $region7: #{tpu_custom_call.1} parent=1 // pred_check_branch
      %24 = sbr.rel (0) target = $region9
    $region8: #{tpu_custom_call.1} parent=1 // pred_region
      %s26 = ssub.s32 64, 64
      %27 = vsyncadd [#allocation6], %s26
      %s29 = sshll.u32 [#allocation5], 4
      %s30 = int_to_ptr.vmem [resolvable:$true] %s29
      %32 = dma.hbm_to_vmem [thread:$0]  %s1, 64, %s30, [#allocation6]
    $region9: #{tpu_custom_call.1} parent=1 // pred_fallthru
      _
    // Predicated region
    $region10: #{tpu_custom_call.1} parent=1 // pred_check
      _
    $region11: #{tpu_custom_call.1} parent=1 // pred_check_branch
      %34 = sbr.rel (0) target = $region13
    $region12: #{tpu_custom_call.1} parent=1 // pred_region
      _
    $region13: #{tpu_custom_call.1} parent=1 // pred_fallthru
      _
    // Predicated region
    $region14: #{tpu_custom_call.1} parent=1 // pred_check
      _
    $region15: #{tpu_custom_call.1} parent=1 // pred_check_branch
      %36 = sbr.rel (0) target = $region17
    $region16: #{tpu_custom_call.1} parent=1 // pred_region
      _
    $region17: #{tpu_custom_call.1} parent=1 // pred_fallthru
      _
    // Predicated region
    $region18: #{tpu_custom_call.1} parent=1 // pred_check
      _
    $region19: #{tpu_custom_call.1} parent=1 // pred_check_branch
      %38 = sbr.rel (0) target = $region21
    $region20: #{tpu_custom_call.1} parent=1 // pred_region
      _
    $region21: #{tpu_custom_call.1} parent=1 // pred_fallthru
      _
    // Predicated region
    $region22: #{tpu_custom_call.1} parent=1 // pred_check
      _
    $region23: #{tpu_custom_call.1} parent=1 // pred_check_branch
      %40 = sbr.rel (0) target = $region25
    $region24: #{tpu_custom_call.1} parent=1 // pred_region
      %41 = dma.done [#allocation3], 32
    $region25: #{tpu_custom_call.1} parent=1 // pred_fallthru
      _
    // Predicated region
    $region26: #{tpu_custom_call.1} parent=1 // pred_check
      _
    $region27: #{tpu_custom_call.1} parent=1 // pred_check_branch
      %43 = sbr.rel (0) target = $region29
    $region28: #{tpu_custom_call.1} parent=1 // pred_region
      %44 = dma.done [#allocation6], 64
    $region29: #{tpu_custom_call.1} parent=1 // pred_fallthru
      _
    %v45 = vld [vmem:[#allocation2] sm:$0x3]
    %v46 = vld [vmem:[%s2] sm:$0x1]
    %v47 = vld [vmem:[#allocation5] sm:$0x1]
    %49 = vset.pattern.permute.xlu0 0
    %50 = vperm.xlu0 %49, %v45
    %v51 = vpop.permute.xlu0 %50
    %v53 = vlaneseq
    %v54 = vshrl.u32 %v53, 7
    %v55 = vsub.s32 0, %v54
    %v56 = vrot.slane %v47, %v55
    %v57 = vmul.f32 %v51, %v56
    %v59 = vlaneseq
    %v60 = vshrl.u32 %v59, 7
    %v61 = vsub.s32 0, %v60
    %v62 = vrot.slane %v46, %v61
    %v64 = vadd.f32 %v62, %v57
    %v65 = vld [vmem:[#allocation5 + $0x1] sm:$0x1]
    %66 = vset.pattern.permute.xlu0 1
    %67 = vperm.xlu0 %66, %v45
    %v68 = vpop.permute.xlu0 %67
    %v70 = vlaneseq
    %v71 = vshrl.u32 %v70, 7
    %v72 = vsub.s32 0, %v71
    %v73 = vrot.slane %v65, %v72
    %v74 = vmul.f32 %v68, %v73
    %v75 = vadd.f32 %v64, %v74
    %v76 = vld [vmem:[#allocation5 + $0x2] sm:$0x1]
    %77 = vset.pattern.permute.xlu0 2
    %78 = vperm.xlu0 %77, %v45
    %v79 = vpop.permute.xlu0 %78
    %v81 = vlaneseq
    %v82 = vshrl.u32 %v81, 7
    %v83 = vsub.s32 0, %v82
    %v84 = vrot.slane %v76, %v83
    %v85 = vmul.f32 %v79, %v84
    %v86 = vadd.f32 %v75, %v85
    %v87 = vld [vmem:[#allocation5 + $0x3] sm:$0x1]
    %88 = vset.pattern.permute.xlu0 3
    %89 = vperm.xlu0 %88, %v45
    %v90 = vpop.permute.xlu0 %89
    %v92 = vlaneseq
    %v93 = vshrl.u32 %v92, 7
    %v94 = vsub.s32 0, %v93
    %v95 = vrot.slane %v87, %v94
    %v96 = vmul.f32 %v90, %v95
    %v97 = vadd.f32 %v86, %v96
    %v98 = vmax.f32 %v97, 0.0
    %v99 = vld [vmem:[%s3] sm:$0x1]
    %v100 = vlaneseq
    %v101 = vshrl.u32 %v100, 7
    %v102 = vsub.s32 0, %v101
    %v103 = vrot.slane %v99, %v102
    %v104 = vmul.f32 %v98, %v103
    %vm105 = vcmask 1041408
    %v106 = vsel %vm105, %v104, 0.0
    %107 = vadd.xlane.f32.xlu0 %v106
    %v108 = vpop.xlane.xlu0 %107
    %v109 = vld [vmem:[%s4] sm:$0x1]
    %v111 = vlaneseq
    %v112 = vshrl.u32 %v111, 7
    %v113 = vsub.s32 0, %v112
    %v114 = vrot.slane %v109, %v113
    %v116 = vadd.f32 %v108, %v114
    %v117 = vld [vmem:[%s3 + $0x1] sm:$0x1]
    %v118 = vlaneseq
    %v119 = vshrl.u32 %v118, 7
    %v120 = vsub.s32 0, %v119
    %v121 = vrot.slane %v117, %v120
    %v122 = vmul.f32 %v98, %v121
    %v123 = vsel %vm105, %v122, 0.0
    %124 = vadd.xlane.f32.xlu0 %v123
    %v125 = vpop.xlane.xlu0 %124
    %v126 = vadd.f32 %v125, %v114
    %v127 = vlaneseq
    %v128 = vand.u32 %v127, 127
    %vm129 = vcmp.eq.s32.totalorder %v128, 0
    %vm130 = vcmp.eq.s32.totalorder %v128, 1
    %132 = vset.pattern.permute.xlu0 1
    %133 = vperm.xlu0 %132, %v126
    %v134 = vpop.permute.xlu0 %133
    %v136 = vsel %vm130, %v134, 0.0
    %138 = vset.pattern.permute.xlu0 0
    %139 = vperm.xlu0 %138, %v116
    %v140 = vpop.permute.xlu0 %139
    %v142 = vsel %vm129, %v140, %v136
    %v143 = vsel %vm105, %v142, -inf
    %v144 = vrot.slane %v143, 4
    %v145 = vmax.f32 %v143, %v144
    %v146 = vrot.slane %v145, 2
    %v147 = vmax.f32 %v145, %v146
    %v148 = vrot.slane %v147, 1
    %v149 = vmax.f32 %v147, %v148
    %v150 = vsub.f32 %v142, %v149
    %v151 = vmul.f32 %v150, 1.442695
    %v152 = vpow.pop %v151
    %v153 = vsel %vm105, %v152, 0.0
    %v154 = vrot.slane %v153, 4
    %v155 = vadd.f32 %v153, %v154
    %v156 = vrot.slane %v155, 2
    %v157 = vadd.f32 %v155, %v156
    %v158 = vrot.slane %v157, 1
    %v159 = vadd.f32 %v157, %v158
    %v160 = vrcp.pop %v159
    %v161 = vmul.f32 %v159, %v160
    %v162 = vsub.f32 2.0, %v161
    %v163 = vmul.f32 %v160, %v162
    %v164 = vmul.f32 %v152, %v163
    %165 = vst [vmem:[#allocation7] sm:$0x3] %v164
    // Predicated region
    $region30: #{tpu_custom_call.1} parent=1 // pred_check
      _
    $region31: #{tpu_custom_call.1} parent=1 // pred_check_branch
      %167 = sbr.rel (0) target = $region33
    $region32: #{tpu_custom_call.1} parent=1 // pred_region
      %s169 = ssub.s32 32, 32
      %170 = vsyncadd [#allocation4], %s169
      %s172 = sshll.u32 [#allocation7], 4
      %s173 = int_to_ptr.vmem [resolvable:$true] %s172
      %175 = dma.vmem_to_hbm [thread:$0]  %s173, 32, %s5, [#allocation4]
    $region33: #{tpu_custom_call.1} parent=1 // pred_fallthru
      _
    // Predicated region
    $region34: #{tpu_custom_call.1} parent=1 // pred_check
      _
    $region35: #{tpu_custom_call.1} parent=1 // pred_check_branch
      %177 = sbr.rel (0) target = $region37
    $region36: #{tpu_custom_call.1} parent=1 // pred_region
      %178 = dma.done [#allocation4], 32
    $region37: #{tpu_custom_call.1} parent=1 // pred_fallthru
      _
    %179 = vsyncpa [#allocation3], 1
    %180 = vsyncpa [#allocation6], 1
    %181 = vsyncpa [#allocation4], 1

</llo_original>
